<compile_context>
chip_gen: v6e
topology: v6e:2x2x1
jax: 0.10.0
libtpu: 0.0.40
codegen_flags: <defaults>
</compile_context>

<pallas_src>
import math
from functools import partial

import jax
import jax.numpy as jnp
from jax import lax
from jax.experimental import pallas as pl
from jax.experimental.pallas import tpu as pltpu


def _mhsa_kernel(x_ref, wqkv_ref, bqkv_ref, wo_ref, bo_ref, o_ref, *,
                 seq, s_pad, e_pad, scale, operand_dtype):
    # x_ref:    (block_b, S_pad, Ep)
    # wqkv_ref: (Ep, 3*Ep)   bqkv_ref: (1, 3*Ep)
    # wo_ref:   (Ep, Ep)     bo_ref:   (1, Ep)
    # o_ref:    (block_b, S_pad, Ep)
    bb = x_ref.shape[0]

    # Merge (block_b, S_pad) -> rows on an 8-row sublane boundary (free).
    x = x_ref[...].reshape(bb * s_pad, e_pad).astype(operand_dtype)

    # Fused Q/K/V projection: one MXU push with N = 3*Ep, f32 accumulation.
    qkv = jnp.dot(x, wqkv_ref[...].astype(operand_dtype),
                  preferred_element_type=jnp.float32)
    qkv = qkv + bqkv_ref[...]

    q = qkv[:, :e_pad].reshape(bb, s_pad, e_pad)
    k = qkv[:, e_pad:2 * e_pad].reshape(bb, s_pad, e_pad)
    v = qkv[:, 2 * e_pad:].reshape(bb, s_pad, e_pad)

    # scores = Q @ K^T / sqrt(E): contract the feature dim of both operands
    # directly (no explicit .T -> no XLU relayout of K).
    scores = jnp.einsum("bqd,bkd->bqk",
                        q.astype(operand_dtype), k.astype(operand_dtype),
                        preferred_element_type=jnp.float32) * scale

    # Mask padded key positions so they receive zero probability mass.
    if s_pad > seq:
        key_ids = lax.broadcasted_iota(jnp.int32, (1, 1, s_pad), 2)
        scores = jnp.where(key_ids < seq, scores, jnp.float32(-1e30))

    # Numerically stable softmax over the key axis; denominator on the EUP.
    m = jnp.max(scores, axis=-1, keepdims=True)
    p = jnp.exp(scores - m)
    weights = p * pl.reciprocal(jnp.sum(p, axis=-1, keepdims=True), approx=True)

    ctx = jnp.einsum("bqk,bkd->bqd",
                     weights.astype(operand_dtype), v.astype(operand_dtype),
                     preferred_element_type=jnp.float32)
    ctx = ctx.reshape(bb * s_pad, e_pad)

    y = jnp.dot(ctx.astype(operand_dtype), wo_ref[...].astype(operand_dtype),
                preferred_element_type=jnp.float32) + bo_ref[...]
    # dropout(p=0.1) in eval mode == identity
    o_ref[...] = y.reshape(bb, s_pad, e_pad).astype(o_ref.dtype)


def pack_mhsa_params(params, embed_dim):
    """One-time packing: torch (out, in) weights -> padded (in, out), QKV fused.

    Do this at init, NOT per forward call (avoids a per-call HBM round trip
    of transpose/pad/concat XLA ops).
    """
    E = embed_dim
    Ep = max(128, ((E + 127) // 128) * 128)  # lane-dense embed dim

    def pad_w(w):  # torch (out, in) -> padded (in, out)
        return jnp.pad(w.T, ((0, Ep - E), (0, Ep - E)))

    def pad_b(b):
        return jnp.pad(b, (0, Ep - E))

    wqkv = jnp.concatenate(
        [pad_w(params["wq"]), pad_w(params["wk"]), pad_w(params["wv"])], axis=1)
    bqkv = jnp.concatenate(
        [pad_b(params["bq"]), pad_b(params["bk"]), pad_b(params["bv"])]
    ).reshape(1, 3 * Ep)
    wo = pad_w(params["wo"])
    bo = pad_b(params["bo"]).reshape(1, Ep)
    return {"wqkv": wqkv, "bqkv": bqkv, "wo": wo, "bo": bo,
            "embed_dim": E, "e_pad": Ep}


def multi_head_self_attention(x, packed, *, block_rows=512,
                              operand_dtype=jnp.float32):
    """x: (B, S, E) float32. packed: output of pack_mhsa_params."""
    B, S, E = x.shape
    assert E == packed["embed_dim"]
    Ep = packed["e_pad"]
    scale = 1.0 / math.sqrt(E)

    # Sequence padded to an 8-row sublane multiple (f32); padded keys masked
    # in-kernel so the result is exact for valid rows.
    S_pad = max(8, ((S + 7) // 8) * 8)

    # Batches per grid step: target ~block_rows matmul rows per step so the
    # MXU sees a large M; full sequence per step keeps softmax local.
    block_b = max(1, min(B, block_rows // S_pad))
    B_pad = ((B + block_b - 1) // block_b) * block_b
    grid = (B_pad // block_b,)

    xp = x
    if B_pad != B or S_pad != S or Ep != E:
        xp = jnp.pad(x, ((0, B_pad - B), (0, S_pad - S), (0, Ep - E)))

    kernel = partial(_mhsa_kernel, seq=S, s_pad=S_pad, e_pad=Ep, scale=scale,
                     operand_dtype=operand_dtype)

    # VMEM budget: double-buffered x/out tiles + resident weights (x2 buffers)
    # + f32 intermediates (qkv is 3x the activation tile) with 2x margin.
    blk_bytes = block_b * S_pad * Ep * 4
    w_bytes = (Ep * 3 * Ep + 3 * Ep + Ep * Ep + Ep) * 4
    interm_bytes = 6 * blk_bytes + 2 * block_b * S_pad * S_pad * 4
    est = 2 * (2 * blk_bytes) + 2 * w_bytes + interm_bytes
    vmem_limit = int(min(100 * 1024 * 1024, max(32 * 1024 * 1024, 2 * est)))

    out = pl.pallas_call(
        kernel,
        out_shape=jax.ShapeDtypeStruct((B_pad, S_pad, Ep), x.dtype),
        grid=grid,
        in_specs=[
            # Batch-tiled activations (auto double-buffered prefetch).
            pl.BlockSpec((block_b, S_pad, Ep), lambda b: (b, 0, 0)),
            # Weights / biases resident across the whole grid.
            pl.BlockSpec((Ep, 3 * Ep), lambda b: (0, 0)),
            pl.BlockSpec((1, 3 * Ep), lambda b: (0, 0)),
            pl.BlockSpec((Ep, Ep), lambda b: (0, 0)),
            pl.BlockSpec((1, Ep), lambda b: (0, 0)),
        ],
        out_specs=pl.BlockSpec((block_b, S_pad, Ep), lambda b: (b, 0, 0)),
        compiler_params=pltpu.CompilerParams(
            dimension_semantics=("parallel",),   # shards batch tiles over v7x's 2 TCs
            vmem_limit_bytes=vmem_limit,
        ),
    )(xp, packed["wqkv"], packed["bqkv"], packed["wo"], packed["bo"])

    if B_pad != B or S_pad != S or Ep != E:
        out = out[:B, :S, :E]
    return out


def _reference(x, params):
    """Pure-JAX reference matching the PyTorch forward (eval mode)."""
    E = x.shape[-1]
    q = x @ params["wq"].T + params["bq"]
    k = x @ params["wk"].T + params["bk"]
    v = x @ params["wv"].T + params["bv"]
    scores = jnp.einsum("bqe,bke->bqk", q, k) / math.sqrt(E)
    w = jax.nn.softmax(scores, axis=-1)
    out = jnp.einsum("bqk,bke->bqe", w, v)
    return out @ params["wo"].T + params["bo"]


if __name__ == "__main__":
    B, S, E = 2, 8, 32
    num_heads = 4  # unused by the reference forward (it never splits heads)

    key = jax.random.PRNGKey(0)
    keys = jax.random.split(key, 9)
    bound = 1.0 / math.sqrt(E)
    params = {
        "wq": jax.random.uniform(keys[0], (E, E), jnp.float32, -bound, bound),
        "bq": jax.random.uniform(keys[1], (E,), jnp.float32, -bound, bound),
        "wk": jax.random.uniform(keys[2], (E, E), jnp.float32, -bound, bound),
        "bk": jax.random.uniform(keys[3], (E,), jnp.float32, -bound, bound),
        "wv": jax.random.uniform(keys[4], (E, E), jnp.float32, -bound, bound),
        "bv": jax.random.uniform(keys[5], (E,), jnp.float32, -bound, bound),
        "wo": jax.random.uniform(keys[6], (E, E), jnp.float32, -bound, bound),
        "bo": jax.random.uniform(keys[7], (E,), jnp.float32, -bound, bound),
    }
    x = jax.random.normal(keys[8], (B, S, E), jnp.float32)

    packed = pack_mhsa_params(params, E)   # one-time weight packing
    ref = _reference(x, params)

    # Default tiling (all batches in one grid step at this toy size).
    out = jax.block_until_ready(multi_head_self_attention(x, packed))
    assert out.shape == (B, S, E)
    assert jnp.allclose(out, ref, atol=2e-3, rtol=2e-3), "mismatch vs reference"

    # Force a multi-step grid (block_b=1 -> grid=(2,)) to exercise the
    # pipelined BlockSpec index_maps as well.
    out2 = jax.block_until_ready(
        multi_head_self_attention(x, packed, block_rows=8))
    assert jnp.allclose(out2, ref, atol=2e-3, rtol=2e-3), "mismatch (gridded)"

    print("KERNEL_OK")
</pallas_src>

<mosaic_0001>
module attributes {stable_mosaic.version = 11 : i64} {
  func.func @_mhsa_kernel(%arg0: i32, %arg1: memref<2x8x128xf32, #tpu.memory_space<vmem>>, %arg2: memref<128x384xf32, #tpu.memory_space<vmem>>, %arg3: memref<1x384xf32, #tpu.memory_space<vmem>>, %arg4: memref<128x128xf32, #tpu.memory_space<vmem>>, %arg5: memref<1x128xf32, #tpu.memory_space<vmem>>, %arg6: memref<2x8x128xf32, #tpu.memory_space<vmem>>) attributes {dimension_semantics = [#tpu.dimension_semantics<parallel>], iteration_bounds = array<i64: 1>, scalar_prefetch = 0 : i64, scratch_operands = 0 : i64, tpu.core_type = #tpu.core_type<tc>, window_params = [{transform_indices = @transform_0, window_bounds = array<i64: 2, 8, 128>}, {pipeline_mode = #tpu.pipeline_mode<synchronous>, transform_indices = @transform_1, window_bounds = array<i64: 128, 384>}, {pipeline_mode = #tpu.pipeline_mode<synchronous>, transform_indices = @transform_2, window_bounds = array<i64: 1, 384>}, {pipeline_mode = #tpu.pipeline_mode<synchronous>, transform_indices = @transform_3, window_bounds = array<i64: 128, 128>}, {pipeline_mode = #tpu.pipeline_mode<synchronous>, transform_indices = @transform_4, window_bounds = array<i64: 1, 128>}, {transform_indices = @transform_5, window_bounds = array<i64: 2, 8, 128>}]} {
    %c0 = arith.constant 0 : index
    %c0_0 = arith.constant 0 : index
    %c0_1 = arith.constant 0 : index
    %0 = vector.load %arg1[%c0, %c0_0, %c0_1] : memref<2x8x128xf32, #tpu.memory_space<vmem>>, vector<2x8x128xf32>
    %1 = vector.shape_cast %0 : vector<2x8x128xf32> to vector<16x128xf32>
    %c0_2 = arith.constant 0 : index
    %c0_3 = arith.constant 0 : index
    %2 = vector.load %arg2[%c0_2, %c0_3] : memref<128x384xf32, #tpu.memory_space<vmem>>, vector<128x384xf32>
    %cst = arith.constant dense<0.000000e+00> : vector<16x384xf32>
    %3 = tpu.matmul %1, %2, %cst {dimension_numbers = #tpu.dot_dimension_numbers<[1], [0], [0], [1], [0, 0, 1, 1], [], []>} : vector<16x128xf32>, vector<128x384xf32>, vector<16x384xf32> -> vector<16x384xf32>
    %c0_4 = arith.constant 0 : index
    %c0_5 = arith.constant 0 : index
    %4 = vector.load %arg3[%c0_4, %c0_5] : memref<1x384xf32, #tpu.memory_space<vmem>>, vector<1x384xf32>
    %5 = vector.broadcast %4 : vector<1x384xf32> to vector<16x384xf32>
    %6 = arith.addf %3, %5 : vector<16x384xf32>
    %7 = vector.extract_strided_slice %6 {offsets = [0, 0], sizes = [16, 128], strides = [1, 1]} : vector<16x384xf32> to vector<16x128xf32>
    %8 = vector.shape_cast %7 : vector<16x128xf32> to vector<2x8x128xf32>
    %9 = vector.extract_strided_slice %6 {offsets = [0, 128], sizes = [16, 128], strides = [1, 1]} : vector<16x384xf32> to vector<16x128xf32>
    %10 = vector.shape_cast %9 : vector<16x128xf32> to vector<2x8x128xf32>
    %11 = vector.extract_strided_slice %6 {offsets = [0, 256], sizes = [16, 128], strides = [1, 1]} : vector<16x384xf32> to vector<16x128xf32>
    %12 = vector.shape_cast %11 : vector<16x128xf32> to vector<2x8x128xf32>
    "tpu.trace_start"() <{level = 10 : i32, message = "bqd,bkd->bqk"}> : () -> ()
    %cst_6 = arith.constant dense<0.000000e+00> : vector<2x8x8xf32>
    %13 = tpu.matmul %8, %10, %cst_6 {dimension_numbers = #tpu.dot_dimension_numbers<[2], [2], [1], [1], [0, 0, 0, 1, 1, 1], [0], [0]>} : vector<2x8x128xf32>, vector<2x8x128xf32>, vector<2x8x8xf32> -> vector<2x8x8xf32>
    "tpu.trace_stop"() : () -> ()
    %cst_7 = arith.constant 0.176776692 : f32
    %14 = vector.broadcast %cst_7 : f32 to vector<2x8x8xf32>
    %15 = arith.mulf %13, %14 : vector<2x8x8xf32>
    %cst_8 = arith.constant dense<0xFF800000> : vector<2x8xf32>
    %16 = vector.multi_reduction <maximumf>, %15, %cst_8 [2] : vector<2x8x8xf32> to vector<2x8xf32>
    %17 = vector.shape_cast %16 : vector<2x8xf32> to vector<2x8x1xf32>
    %18 = vector.broadcast %17 : vector<2x8x1xf32> to vector<2x8x8xf32>
    %19 = arith.subf %15, %18 : vector<2x8x8xf32>
    %20 = math.exp %19 : vector<2x8x8xf32>
    %cst_9 = arith.constant dense<0.000000e+00> : vector<2x8xf32>
    %21 = vector.multi_reduction <add>, %20, %cst_9 [2] : vector<2x8x8xf32> to vector<2x8xf32>
    %22 = vector.shape_cast %21 : vector<2x8xf32> to vector<2x8x1xf32>
    %23 = tpu.reciprocal %22 {approx = true} : vector<2x8x1xf32> -> vector<2x8x1xf32>
    %24 = vector.broadcast %23 : vector<2x8x1xf32> to vector<2x8x8xf32>
    %25 = arith.mulf %20, %24 : vector<2x8x8xf32>
    "tpu.trace_start"() <{level = 10 : i32, message = "bqk,bkd->bqd"}> : () -> ()
    %cst_10 = arith.constant dense<0.000000e+00> : vector<2x8x128xf32>
    %26 = tpu.matmul %25, %12, %cst_10 {dimension_numbers = #tpu.dot_dimension_numbers<[2], [1], [1], [2], [0, 0, 0, 1, 1, 2], [0], [0]>} : vector<2x8x8xf32>, vector<2x8x128xf32>, vector<2x8x128xf32> -> vector<2x8x128xf32>
    "tpu.trace_stop"() : () -> ()
    %27 = vector.shape_cast %26 : vector<2x8x128xf32> to vector<16x128xf32>
    %c0_11 = arith.constant 0 : index
    %c0_12 = arith.constant 0 : index
    %28 = vector.load %arg4[%c0_11, %c0_12] : memref<128x128xf32, #tpu.memory_space<vmem>>, vector<128x128xf32>
    %cst_13 = arith.constant dense<0.000000e+00> : vector<16x128xf32>
    %29 = tpu.matmul %27, %28, %cst_13 {dimension_numbers = #tpu.dot_dimension_numbers<[1], [0], [0], [1], [0, 0, 1, 1], [], []>} : vector<16x128xf32>, vector<128x128xf32>, vector<16x128xf32> -> vector<16x128xf32>
    %c0_14 = arith.constant 0 : index
    %c0_15 = arith.constant 0 : index
    %30 = vector.load %arg5[%c0_14, %c0_15] : memref<1x128xf32, #tpu.memory_space<vmem>>, vector<1x128xf32>
    %31 = vector.broadcast %30 : vector<1x128xf32> to vector<16x128xf32>
    %32 = arith.addf %29, %31 : vector<16x128xf32>
    %33 = vector.shape_cast %32 : vector<16x128xf32> to vector<2x8x128xf32>
    %c0_16 = arith.constant 0 : index
    %c0_17 = arith.constant 0 : index
    %c0_18 = arith.constant 0 : index
    %34 = vector.load %arg6[%c0_16, %c0_17, %c0_18] : memref<2x8x128xf32, #tpu.memory_space<vmem>>, vector<2x8x128xf32>
    tpu.vector_store %arg6[%c0_16, %c0_17, %c0_18], %33 {strides = array<i32>} : memref<2x8x128xf32, #tpu.memory_space<vmem>>, vector<2x8x128xf32>,
    return
  }
  func.func @transform_0(%arg0: i32) -> (i32, i32, i32) {
    %c0_i32 = arith.constant 0 : i32
    %c0_i32_0 = arith.constant 0 : i32
    %c0_i32_1 = arith.constant 0 : i32
    return %arg0, %c0_i32, %c0_i32_0 : i32, i32, i32
  }
  func.func @transform_1(%arg0: i32) -> (i32, i32) {
    %c0_i32 = arith.constant 0 : i32
    %c0_i32_0 = arith.constant 0 : i32
    %c0_i32_1 = arith.constant 0 : i32
    return %c0_i32, %c0_i32_0 : i32, i32
  }
  func.func @transform_2(%arg0: i32) -> (i32, i32) {
    %c0_i32 = arith.constant 0 : i32
    %c0_i32_0 = arith.constant 0 : i32
    %c0_i32_1 = arith.constant 0 : i32
    return %c0_i32, %c0_i32_0 : i32, i32
  }
  func.func @transform_3(%arg0: i32) -> (i32, i32) {
    %c0_i32 = arith.constant 0 : i32
    %c0_i32_0 = arith.constant 0 : i32
    %c0_i32_1 = arith.constant 0 : i32
    return %c0_i32, %c0_i32_0 : i32, i32
  }
  func.func @transform_4(%arg0: i32) -> (i32, i32) {
    %c0_i32 = arith.constant 0 : i32
    %c0_i32_0 = arith.constant 0 : i32
    %c0_i32_1 = arith.constant 0 : i32
    return %c0_i32, %c0_i32_0 : i32, i32
  }
  func.func @transform_5(%arg0: i32) -> (i32, i32, i32) {
    %c0_i32 = arith.constant 0 : i32
    %c0_i32_0 = arith.constant 0 : i32
    %c0_i32_1 = arith.constant 0 : i32
    return %arg0, %c0_i32, %c0_i32_0 : i32, i32, i32
  }
}

</mosaic_0001>

<llo_original>
// kernel: tpu_custom_call.1
$region0: #{tpu_custom_call.1}
  #allocation0 [shape = 'u32[]', space=smem, size = 0x4, offset = 0x4, fixed_abs, tag = 'smem constant byte address 0x4 - core index']
  #allocation1 [shape = 'u32[144,128]{1,0:T(1,128)}', space=vmem, size = 0x12000, scoped, tag = 'internal scratch']
  %s0 = inlined_call_operand.hbm [shape: f32[2,8,128], index: 0, kind: input, shape index: {}]
  %s1 = inlined_call_operand.hbm [shape: f32[128,384], index: 1, kind: input, shape index: {}]
  %s2 = inlined_call_operand.vmem [shape: f32[1,384], index: 2, kind: input, shape index: {}]
  %s3 = inlined_call_operand.hbm [shape: f32[128,128], index: 3, kind: input, shape index: {}]
  %s4 = inlined_call_operand.vmem [shape: f32[1,128], index: 4, kind: input, shape index: {}]
  %s5 = inlined_call_operand.hbm [shape: f32[2,8,128], index: 5, kind: output, shape index: {}]
  %s6 = sld [smem:[#allocation0]]
  $region42: #{tpu_custom_call.1} parent=0
    _
  %s8 = ssub.s32 1, %s6
  %s9 = scalar_select 0, %s8, %s6
  $region1: #{tpu_custom_call.1} parent=0
    #allocation2 [shape = 'u8[8192]{0}', space=vmem, size = 0x2000, scoped, tag = 'input window, operand 0, single buffered']
    #allocation3 [shape = 's32[1]{0}', space=sflag, size = 0x4, scoped, tag = 'scoped memory for tpu_custom_call.1']
    #allocation4 [shape = 's32[1]{0}', space=sflag, size = 0x4, scoped, tag = 'scoped memory for tpu_custom_call.1']
    #allocation5 [shape = 'u8[196608]{0}', space=vmem, size = 0x30000, scoped, tag = 'input window, operand 1, single buffered']
    #allocation6 [shape = 's32[1]{0}', space=sflag, size = 0x4, scoped, tag = 'scoped memory for tpu_custom_call.1']
    #allocation7 [shape = 'u8[65536]{0}', space=vmem, size = 0x10000, scoped, tag = 'input window, operand 3, single buffered']
    #allocation8 [shape = 'u8[8192]{0}', space=vmem, size = 0x2000, scoped, tag = 'output window, operand 0, single buffered']
    %10 = vsyncpa [#allocation3], 0
    %11 = vsyncpa [#allocation6], 0
    %12 = vsyncpa [#allocation4], 0
    // Predicated region
    $region2: #{tpu_custom_call.1} parent=1 // pred_check
      _
    $region3: #{tpu_custom_call.1} parent=1 // pred_check_branch
      %14 = sbr.rel (0) target = $region5
    $region4: #{tpu_custom_call.1} parent=1 // pred_region
      %s16 = ssub.s32 256, 256
      %17 = vsyncadd [#allocation3], %s16
      %s18 = sshll.u32 [#allocation2], 4
      %s19 = int_to_ptr.vmem [resolvable:$true] %s18
      %24 = dma.hbm_to_vmem [thread:$0]  %s0, 256, %s19, [#allocation3], 128, 128, 8
    $region5: #{tpu_custom_call.1} parent=1 // pred_fallthru
      _
    // Predicated region
    $region6: #{tpu_custom_call.1} parent=1 // pred_check
      _
    $region7: #{tpu_custom_call.1} parent=1 // pred_check_branch
      %26 = sbr.rel (0) target = $region9
    $region8: #{tpu_custom_call.1} parent=1 // pred_region
      %s28 = ssub.s32 6144, 6144
      %29 = vsyncadd [#allocation6], %s28
      %s30 = sshll.u32 [#allocation5], 4
      %s31 = int_to_ptr.vmem [resolvable:$true] %s30
      %36 = dma.hbm_to_vmem [thread:$0]  %s1, 6144, %s31, [#allocation6], 384, 384, 24
    $region9: #{tpu_custom_call.1} parent=1 // pred_fallthru
      _
    // Predicated region
    $region10: #{tpu_custom_call.1} parent=1 // pred_check
      _
    $region11: #{tpu_custom_call.1} parent=1 // pred_check_branch
      %38 = sbr.rel (0) target = $region13
    $region12: #{tpu_custom_call.1} parent=1 // pred_region
      _
    $region13: #{tpu_custom_call.1} parent=1 // pred_fallthru
      _
    // Predicated region
    $region14: #{tpu_custom_call.1} parent=1 // pred_check
      _
    $region15: #{tpu_custom_call.1} parent=1 // pred_check_branch
      %40 = sbr.rel (0) target = $region17
    $region16: #{tpu_custom_call.1} parent=1 // pred_region
      %s42 = ssub.s32 2048, 2048
      %43 = vsyncadd [#allocation6], %s42
      %s44 = sshll.u32 [#allocation7], 4
      %s45 = int_to_ptr.vmem [resolvable:$true] %s44
      %50 = dma.hbm_to_vmem [thread:$0]  %s3, 2048, %s45, [#allocation6], 128, 128, 8
    $region17: #{tpu_custom_call.1} parent=1 // pred_fallthru
      _
    // Predicated region
    $region18: #{tpu_custom_call.1} parent=1 // pred_check
      _
    $region19: #{tpu_custom_call.1} parent=1 // pred_check_branch
      %52 = sbr.rel (0) target = $region21
    $region20: #{tpu_custom_call.1} parent=1 // pred_region
      _
    $region21: #{tpu_custom_call.1} parent=1 // pred_fallthru
      _
    // Predicated region
    $region22: #{tpu_custom_call.1} parent=1 // pred_check
      _
    $region23: #{tpu_custom_call.1} parent=1 // pred_check_branch
      %54 = sbr.rel (0) target = $region25
    $region24: #{tpu_custom_call.1} parent=1 // pred_region
      %55 = dma.done [#allocation3], 256
    $region25: #{tpu_custom_call.1} parent=1 // pred_fallthru
      _
    // Predicated region
    $region26: #{tpu_custom_call.1} parent=1 // pred_check
      _
    $region27: #{tpu_custom_call.1} parent=1 // pred_check_branch
      %57 = sbr.rel (0) target = $region29
    $region28: #{tpu_custom_call.1} parent=1 // pred_region
      %58 = dma.done [#allocation6], 6144
    $region29: #{tpu_custom_call.1} parent=1 // pred_fallthru
      _
    // Predicated region
    $region30: #{tpu_custom_call.1} parent=1 // pred_check
      _
    $region31: #{tpu_custom_call.1} parent=1 // pred_check_branch
      %60 = sbr.rel (0) target = $region33
    $region32: #{tpu_custom_call.1} parent=1 // pred_region
      %61 = dma.done [#allocation6], 2048
    $region33: #{tpu_custom_call.1} parent=1 // pred_fallthru
      _
    %v62 = vld [vmem:[#allocation2] sm:$0xff]
    %v63 = vld [vmem:[#allocation2 + $0x8] sm:$0xff]
    %v64 = vld [vmem:[#allocation5] sm:$0xff]
    %v65 = vld [vmem:[#allocation5 + $0x8] sm:$0xff]
    %v66 = vld [vmem:[#allocation5 + $0x10] sm:$0xff]
    %v67 = vld [vmem:[#allocation5 + $0x18] sm:$0xff]
    %v68 = vld [vmem:[#allocation5 + $0x20] sm:$0xff]
    %v69 = vld [vmem:[#allocation5 + $0x28] sm:$0xff]
    %v70 = vld [vmem:[#allocation5 + $0x30] sm:$0xff]
    %v71 = vld [vmem:[#allocation5 + $0x38] sm:$0xff]
    %v72 = vld [vmem:[#allocation5 + $0x40] sm:$0xff]
    %v73 = vld [vmem:[#allocation5 + $0x48] sm:$0xff]
    %v74 = vld [vmem:[#allocation5 + $0x50] sm:$0xff]
    %v75 = vld [vmem:[#allocation5 + $0x58] sm:$0xff]
    %v76 = vld [vmem:[#allocation5 + $0x60] sm:$0xff]
    %v77 = vld [vmem:[#allocation5 + $0x68] sm:$0xff]
    %v78 = vld [vmem:[#allocation5 + $0x70] sm:$0xff]
    %v79 = vld [vmem:[#allocation5 + $0x78] sm:$0xff]
    %v80 = vld [vmem:[#allocation5 + $0x80] sm:$0xff]
    %v81 = vld [vmem:[#allocation5 + $0x88] sm:$0xff]
    %v82 = vld [vmem:[#allocation5 + $0x90] sm:$0xff]
    %v83 = vld [vmem:[#allocation5 + $0x98] sm:$0xff]
    %v84 = vld [vmem:[#allocation5 + $0xa0] sm:$0xff]
    %v85 = vld [vmem:[#allocation5 + $0xa8] sm:$0xff]
    %v86 = vld [vmem:[#allocation5 + $0xb0] sm:$0xff]
    %v87 = vld [vmem:[#allocation5 + $0xb8] sm:$0xff]
    %v88 = vld [vmem:[#allocation5 + $0xc0] sm:$0xff]
    %v89 = vld [vmem:[#allocation5 + $0xc8] sm:$0xff]
    %v90 = vld [vmem:[#allocation5 + $0xd0] sm:$0xff]
    %v91 = vld [vmem:[#allocation5 + $0xd8] sm:$0xff]
    %v92 = vld [vmem:[#allocation5 + $0xe0] sm:$0xff]
    %v93 = vld [vmem:[#allocation5 + $0xe8] sm:$0xff]
    %v94 = vld [vmem:[#allocation5 + $0xf0] sm:$0xff]
    %v95 = vld [vmem:[#allocation5 + $0xf8] sm:$0xff]
    %v96 = vld [vmem:[#allocation5 + $0x100] sm:$0xff]
    %v97 = vld [vmem:[#allocation5 + $0x108] sm:$0xff]
    %v98 = vld [vmem:[#allocation5 + $0x110] sm:$0xff]
    %v99 = vld [vmem:[#allocation5 + $0x118] sm:$0xff]
    %v100 = vld [vmem:[#allocation5 + $0x120] sm:$0xff]
    %v101 = vld [vmem:[#allocation5 + $0x128] sm:$0xff]
    %v102 = vld [vmem:[#allocation5 + $0x130] sm:$0xff]
    %v103 = vld [vmem:[#allocation5 + $0x138] sm:$0xff]
    %v104 = vld [vmem:[#allocation5 + $0x140] sm:$0xff]
    %v105 = vld [vmem:[#allocation5 + $0x148] sm:$0xff]
    %v106 = vld [vmem:[#allocation5 + $0x150] sm:$0xff]
    %v107 = vld [vmem:[#allocation5 + $0x158] sm:$0xff]
    %v108 = vld [vmem:[#allocation5 + $0x160] sm:$0xff]
    %v109 = vld [vmem:[#allocation5 + $0x168] sm:$0xff]
    %v110 = vld [vmem:[#allocation5 + $0x170] sm:$0xff]
    %v111 = vld [vmem:[#allocation5 + $0x178] sm:$0xff]
    %v112 = vld [vmem:[%s2] sm:$0x7]
    %v114 = vlaneseq
    %v115 = vshrl.u32 %v114, 7
    %v116 = vsub.s32 0, %v115
    %v117 = vrot.slane %v112, %v116
    %v118 = vlaneseq
    %v119 = vshrl.u32 %v118, 7
    %v120 = vsub.s32 1, %v119
    %v121 = vrot.slane %v112, %v120
    %v122 = vlaneseq
    %v123 = vshrl.u32 %v122, 7
    %v124 = vsub.s32 2, %v123
    %v125 = vrot.slane %v112, %v124
    %129 = vmatprep.subr.mxu0 %v110
    %130 = vmatpush1.msra.mxu0 %v109
    %131 = vmatprep.subr.mxu0 %v107
    %132 = vmatpush1.msra.mxu0 %v106
    %133 = vmatprep.subr.mxu0 %v104
    %134 = vmatpush1.msra.mxu0 %v103
    %135 = vmatprep.subr.mxu0 %v101
    %136 = vmatpush1.msra.mxu0 %v100
    %137 = vmatprep.subr.mxu0 %v98
    %138 = vmatpush1.msra.mxu0 %v97
    %139 = vmatprep.subr.mxu0 %v95
    %140 = vmatpush1.msra.mxu0 %v94
    %141 = vmatprep.subr.mxu0 %v92
    %142 = vmatpush1.msra.mxu0 %v91
    %143 = vmatprep.subr.mxu0 %v89
    %144 = vmatpush1.msra.mxu0 %v88
    %145 = vmatprep.subr.mxu0 %v86
    %146 = vmatpush1.msra.mxu0 %v85
    %147 = vmatprep.subr.mxu0 %v83
    %148 = vmatpush1.msra.mxu0 %v82
    %149 = vmatprep.subr.mxu0 %v80
    %150 = vmatpush1.msra.mxu0 %v79
    %151 = vmatprep.subr.mxu0 %v77
    %152 = vmatpush1.msra.mxu0 %v76
    %153 = vmatprep.subr.mxu0 %v74
    %154 = vmatpush1.msra.mxu0 %v73
    %155 = vmatprep.subr.mxu0 %v71
    %156 = vmatpush1.msra.mxu0 %v70
    %157 = vmatprep.subr.mxu0 %v68
    %158 = vmatpush1.msra.mxu0 %v67
    %159 = vmatprep.subr.mxu0 %v65
    %160 = vmatpush1.msra.mxu0 %v64
    %161 = vmatprep.subr.mxu0 0.0
    %162 = vmatpush2.msra.mxu0 0.0
    %163 = vmatprep.subr.mxu0 0.0
    %164 = vmatpush2.msra.mxu0 0.0
    %165 = vmatprep.subr.mxu0 0.0
    %166 = vmatpush2.msra.mxu0 0.0
    %167 = vmatprep.subr.mxu0 0.0
    %168 = vmatpush2.msra.mxu0 0.0
    %169 = vmatprep.subr.mxu0 0.0
    %170 = vmatpush2.msra.mxu0 0.0
    %171 = vmatprep.subr.mxu0 0.0
    %172 = vmatpush2.msra.mxu0 0.0
    %173 = vmatprep.subr.mxu0 0.0
    %174 = vmatpush2.msra.mxu0 0.0
    %175 = vmatprep.subr.mxu0 0.0
    %176 = vmatpush2.msra.mxu0 0.0
    %177 = vmatprep.subr.mxu0 0.0
    %178 = vmatpush2.msra.mxu0 0.0
    %179 = vmatprep.subr.mxu0 0.0
    %180 = vmatpush2.msra.mxu0 0.0
    %181 = vmatprep.subr.mxu0 0.0
    %182 = vmatpush2.msra.mxu0 0.0
    %183 = vmatprep.subr.mxu0 0.0
    %184 = vmatpush2.msra.mxu0 0.0
    %185 = vmatprep.subr.mxu0 0.0
    %186 = vmatpush2.msra.mxu0 0.0
    %187 = vmatprep.subr.mxu0 0.0
    %188 = vmatpush2.msra.mxu0 0.0
    %189 = vmatprep.subr.mxu0 0.0
    %190 = vmatpush2.msra.mxu0 0.0
    %191 = vmatprep.subr.mxu0 0.0
    %192 = vmatpush2.msra.mxu0 0.0
    %193 = vmatprep.mubr.f32.mxu0 0.0
    %194 = vmatmul.mubr.f32.gmra.mxu0 %v62
    %v195 = vpop.f32.mrf.mxu0
    %v196 = vadd.f32 %v117, %v195
    %v197 = vpop.f32.mrf.mxu0
    %v198 = vadd.f32 %v121, %v197
    %199 = vmatprep.mubr.f32.mxu0 0.0
    %200 = vmatmul.mubr.f32.gmra.mxu0 %v63
    %v201 = vpop.f32.mrf.mxu0
    %v202 = vadd.f32 %v117, %v201
    %v203 = vpop.f32.mrf.mxu0
    %v204 = vadd.f32 %v121, %v203
    %205 = vdwg.mxu0
    %206 = vmatprep.subr.mxu0 0.0
    %207 = vmatpush1.msra.mxu0 %v111
    %208 = vmatprep.subr.mxu0 0.0
    %209 = vmatpush1.msra.mxu0 %v108
    %210 = vmatprep.subr.mxu0 0.0
    %211 = vmatpush1.msra.mxu0 %v105
    %212 = vmatprep.subr.mxu0 0.0
    %213 = vmatpush1.msra.mxu0 %v102
    %214 = vmatprep.subr.mxu0 0.0
    %215 = vmatpush1.msra.mxu0 %v99
    %216 = vmatprep.subr.mxu0 0.0
    %217 = vmatpush1.msra.mxu0 %v96
    %218 = vmatprep.subr.mxu0 0.0
    %219 = vmatpush1.msra.mxu0 %v93
    %220 = vmatprep.subr.mxu0 0.0
    %221 = vmatpush1.msra.mxu0 %v90
    %222 = vmatprep.subr.mxu0 0.0
    %223 = vmatpush1.msra.mxu0 %v87
    %224 = vmatprep.subr.mxu0 0.0
    %225 = vmatpush1.msra.mxu0 %v84
    %226 = vmatprep.subr.mxu0 0.0
    %227 = vmatpush1.msra.mxu0 %v81
    %228 = vmatprep.subr.mxu0 0.0
    %229 = vmatpush1.msra.mxu0 %v78
    %230 = vmatprep.subr.mxu0 0.0
    %231 = vmatpush1.msra.mxu0 %v75
    %232 = vmatprep.subr.mxu0 0.0
    %233 = vmatpush1.msra.mxu0 %v72
    %234 = vmatprep.subr.mxu0 0.0
    %235 = vmatpush1.msra.mxu0 %v69
    %236 = vmatprep.subr.mxu0 0.0
    %237 = vmatpush1.msra.mxu0 %v66
    %238 = vmatprep.subr.mxu0 0.0
    %239 = vmatpush2.msra.mxu0 0.0
    %240 = vmatprep.subr.mxu0 0.0
    %241 = vmatpush2.msra.mxu0 0.0
    %242 = vmatprep.subr.mxu0 0.0
    %243 = vmatpush2.msra.mxu0 0.0
    %244 = vmatprep.subr.mxu0 0.0
    %245 = vmatpush2.msra.mxu0 0.0
    %246 = vmatprep.subr.mxu0 0.0
    %247 = vmatpush2.msra.mxu0 0.0
    %248 = vmatprep.subr.mxu0 0.0
    %249 = vmatpush2.msra.mxu0 0.0
    %250 = vmatprep.subr.mxu0 0.0
    %251 = vmatpush2.msra.mxu0 0.0
    %252 = vmatprep.subr.mxu0 0.0
    %253 = vmatpush2.msra.mxu0 0.0
    %254 = vmatprep.subr.mxu0 0.0
    %255 = vmatpush2.msra.mxu0 0.0
    %256 = vmatprep.subr.mxu0 0.0
    %257 = vmatpush2.msra.mxu0 0.0
    %258 = vmatprep.subr.mxu0 0.0
    %259 = vmatpush2.msra.mxu0 0.0
    %260 = vmatprep.subr.mxu0 0.0
    %261 = vmatpush2.msra.mxu0 0.0
    %262 = vmatprep.subr.mxu0 0.0
    %263 = vmatpush2.msra.mxu0 0.0
    %264 = vmatprep.subr.mxu0 0.0
    %265 = vmatpush2.msra.mxu0 0.0
    %266 = vmatprep.subr.mxu0 0.0
    %267 = vmatpush2.msra.mxu0 0.0
    %268 = vmatprep.subr.mxu0 0.0
    %269 = vmatpush2.msra.mxu0 0.0
    %270 = vmatprep.mubr.f32.mxu0 0.0
    %271 = vmatmul.mubr.f32.gmra.mxu0 %v62
    %v272 = vpop.f32.mrf.mxu0
    %v273 = vadd.f32 %v125, %v272
    %v274 = vpop.f32.mrf.mxu0
    %275 = vmatprep.mubr.f32.mxu0 0.0
    %276 = vmatmul.mubr.f32.gmra.mxu0 %v63
    %v277 = vpop.f32.mrf.mxu0
    %v278 = vadd.f32 %v125, %v277
    %v279 = vpop.f32.mrf.mxu0
    %280 = vdwg.mxu0
    %281 = vmatprep.subr.mxu0 0.0
    %282 = vmatpush1.xpose.msra.mxu0 0.0
    %283 = vmatprep.subr.mxu0 0.0
    %284 = vmatpush1.xpose.msra.mxu0 0.0
    %285 = vmatprep.subr.mxu0 0.0
    %286 = vmatpush1.xpose.msra.mxu0 0.0
    %287 = vmatprep.subr.mxu0 0.0
    %288 = vmatpush1.xpose.msra.mxu0 0.0
    %289 = vmatprep.subr.mxu0 0.0
    %290 = vmatpush1.xpose.msra.mxu0 0.0
    %291 = vmatprep.subr.mxu0 0.0
    %292 = vmatpush1.xpose.msra.mxu0 0.0
    %293 = vmatprep.subr.mxu0 0.0
    %294 = vmatpush1.xpose.msra.mxu0 0.0
    %295 = vmatprep.subr.mxu0 0.0
    %296 = vmatpush1.xpose.msra.mxu0 0.0
    %297 = vmatprep.subr.mxu0 0.0
    %298 = vmatpush1.xpose.msra.mxu0 0.0
    %299 = vmatprep.subr.mxu0 0.0
    %300 = vmatpush1.xpose.msra.mxu0 0.0
    %301 = vmatprep.subr.mxu0 0.0
    %302 = vmatpush1.xpose.msra.mxu0 0.0
    %303 = vmatprep.subr.mxu0 0.0
    %304 = vmatpush1.xpose.msra.mxu0 0.0
    %305 = vmatprep.subr.mxu0 0.0
    %306 = vmatpush1.xpose.msra.mxu0 0.0
    %307 = vmatprep.subr.mxu0 0.0
    %308 = vmatpush1.xpose.msra.mxu0 0.0
    %309 = vmatprep.subr.mxu0 0.0
    %310 = vmatpush1.xpose.msra.mxu0 0.0
    %311 = vmatprep.subr.mxu0 0.0
    %312 = vmatpush1.xpose.msra.mxu0 %v198
    %313 = vmatprep.subr.mxu0 0.0
    %314 = vmatpush2.xpose.msra.mxu0 0.0
    %315 = vmatprep.subr.mxu0 0.0
    %316 = vmatpush2.xpose.msra.mxu0 0.0
    %317 = vmatprep.subr.mxu0 0.0
    %318 = vmatpush2.xpose.msra.mxu0 0.0
    %319 = vmatprep.subr.mxu0 0.0
    %320 = vmatpush2.xpose.msra.mxu0 0.0
    %321 = vmatprep.subr.mxu0 0.0
    %322 = vmatpush2.xpose.msra.mxu0 0.0
    %323 = vmatprep.subr.mxu0 0.0
    %324 = vmatpush2.xpose.msra.mxu0 0.0
    %325 = vmatprep.subr.mxu0 0.0
    %326 = vmatpush2.xpose.msra.mxu0 0.0
    %327 = vmatprep.subr.mxu0 0.0
    %328 = vmatpush2.xpose.msra.mxu0 0.0
    %329 = vmatprep.subr.mxu0 0.0
    %330 = vmatpush2.xpose.msra.mxu0 0.0
    %331 = vmatprep.subr.mxu0 0.0
    %332 = vmatpush2.xpose.msra.mxu0 0.0
    %333 = vmatprep.subr.mxu0 0.0
    %334 = vmatpush2.xpose.msra.mxu0 0.0
    %335 = vmatprep.subr.mxu0 0.0
    %336 = vmatpush2.xpose.msra.mxu0 0.0
    %337 = vmatprep.subr.mxu0 0.0
    %338 = vmatpush2.xpose.msra.mxu0 0.0
    %339 = vmatprep.subr.mxu0 0.0
    %340 = vmatpush2.xpose.msra.mxu0 0.0
    %341 = vmatprep.subr.mxu0 0.0
    %342 = vmatpush2.xpose.msra.mxu0 0.0
    %343 = vmatprep.subr.mxu0 0.0
    %344 = vmatpush2.xpose.msra.mxu0 0.0
    %345 = vmatprep.mubr.f32.mxu0 0.0
    %346 = vmatmul.mubr.f32.gmra.mxu0 %v196
    %v347 = vpop.f32.mrf.mxu0
    %v348 = vadd.f32 0.0, %v347
    %v349 = vpop.f32.mrf.mxu0
    %350 = vdwg.mxu0
    %351 = vmatprep.subr.mxu0 0.0
    %352 = vmatpush1.xpose.msra.mxu0 0.0
    %353 = vmatprep.subr.mxu0 0.0
    %354 = vmatpush1.xpose.msra.mxu0 0.0
    %355 = vmatprep.subr.mxu0 0.0
    %356 = vmatpush1.xpose.msra.mxu0 0.0
    %357 = vmatprep.subr.mxu0 0.0
    %358 = vmatpush1.xpose.msra.mxu0 0.0
    %359 = vmatprep.subr.mxu0 0.0
    %360 = vmatpush1.xpose.msra.mxu0 0.0
    %361 = vmatprep.subr.mxu0 0.0
    %362 = vmatpush1.xpose.msra.mxu0 0.0
    %363 = vmatprep.subr.mxu0 0.0
    %364 = vmatpush1.xpose.msra.mxu0 0.0
    %365 = vmatprep.subr.mxu0 0.0
    %366 = vmatpush1.xpose.msra.mxu0 0.0
    %367 = vmatprep.subr.mxu0 0.0
    %368 = vmatpush1.xpose.msra.mxu0 0.0
    %369 = vmatprep.subr.mxu0 0.0
    %370 = vmatpush1.xpose.msra.mxu0 0.0
    %371 = vmatprep.subr.mxu0 0.0
    %372 = vmatpush1.xpose.msra.mxu0 0.0
    %373 = vmatprep.subr.mxu0 0.0
    %374 = vmatpush1.xpose.msra.mxu0 0.0
    %375 = vmatprep.subr.mxu0 0.0
    %376 = vmatpush1.xpose.msra.mxu0 0.0
    %377 = vmatprep.subr.mxu0 0.0
    %378 = vmatpush1.xpose.msra.mxu0 0.0
    %379 = vmatprep.subr.mxu0 0.0
    %380 = vmatpush1.xpose.msra.mxu0 0.0
    %381 = vmatprep.subr.mxu0 0.0
    %382 = vmatpush1.xpose.msra.mxu0 %v204
    %383 = vmatprep.subr.mxu0 0.0
    %384 = vmatpush2.xpose.msra.mxu0 0.0
    %385 = vmatprep.subr.mxu0 0.0
    %386 = vmatpush2.xpose.msra.mxu0 0.0
    %387 = vmatprep.subr.mxu0 0.0
    %388 = vmatpush2.xpose.msra.mxu0 0.0
    %389 = vmatprep.subr.mxu0 0.0
    %390 = vmatpush2.xpose.msra.mxu0 0.0
    %391 = vmatprep.subr.mxu0 0.0
    %392 = vmatpush2.xpose.msra.mxu0 0.0
    %393 = vmatprep.subr.mxu0 0.0
    %394 = vmatpush2.xpose.msra.mxu0 0.0
    %395 = vmatprep.subr.mxu0 0.0
    %396 = vmatpush2.xpose.msra.mxu0 0.0
    %397 = vmatprep.subr.mxu0 0.0
    %398 = vmatpush2.xpose.msra.mxu0 0.0
    %399 = vmatprep.subr.mxu0 0.0
    %400 = vmatpush2.xpose.msra.mxu0 0.0
    %401 = vmatprep.subr.mxu0 0.0
    %402 = vmatpush2.xpose.msra.mxu0 0.0
    %403 = vmatprep.subr.mxu0 0.0
    %404 = vmatpush2.xpose.msra.mxu0 0.0
    %405 = vmatprep.subr.mxu0 0.0
    %406 = vmatpush2.xpose.msra.mxu0 0.0
    %407 = vmatprep.subr.mxu0 0.0
    %408 = vmatpush2.xpose.msra.mxu0 0.0
    %409 = vmatprep.subr.mxu0 0.0
    %410 = vmatpush2.xpose.msra.mxu0 0.0
    %411 = vmatprep.subr.mxu0 0.0
    %412 = vmatpush2.xpose.msra.mxu0 0.0
    %413 = vmatprep.subr.mxu0 0.0
    %414 = vmatpush2.xpose.msra.mxu0 0.0
    %415 = vmatprep.mubr.f32.mxu0 0.0
    %416 = vmatmul.mubr.f32.gmra.mxu0 %v202
    %v417 = vpop.f32.mrf.mxu0
    %v418 = vadd.f32 0.0, %v417
    %v419 = vpop.f32.mrf.mxu0
    %420 = vdwg.mxu0
    %v421 = vmul.f32 %v348, 0.17677669
    %v422 = vmul.f32 %v418, 0.17677669
    %vm423 = vcmask 64512
    %v424 = vsel %vm423, %v421, -inf
    %425 = vmax.xlane.f32.xlu0 %v424
    %v426 = vpop.xlane.xlu0 %425
    %v427 = vsel %vm423, %v422, -inf
    %428 = vmax.xlane.f32.xlu0 %v427
    %v429 = vpop.xlane.xlu0 %428
    %v430 = vsub.f32 %v421, %v426
    %v431 = vsub.f32 %v422, %v429
    %v432 = vmul.f32 %v430, 1.442695
    %v433 = vpow.pop %v432
    %v434 = vmul.f32 %v431, 1.442695
    %v435 = vpow.pop %v434
    %v436 = vsel %vm423, %v433, 0.0
    %437 = vadd.xlane.f32.xlu0 %v436
    %v438 = vpop.xlane.xlu0 %437
    %v439 = vsel %vm423, %v435, 0.0
    %440 = vadd.xlane.f32.xlu0 %v439
    %v441 = vpop.xlane.xlu0 %440
    %v442 = vrcp.pop %v438
    %v443 = vrcp.pop %v441
    %v444 = vmul.f32 %v433, %v442
    %v445 = vmul.f32 %v435, %v443
    %v447 = vsel %vm423, %v444, 0
    %449 = vmatprep.subr.mxu0 0.0
    %450 = vmatpush1.msra.mxu0 0.0
    %451 = vmatprep.subr.mxu0 0.0
    %452 = vmatpush1.msra.mxu0 0.0
    %453 = vmatprep.subr.mxu0 0.0
    %454 = vmatpush1.msra.mxu0 0.0
    %455 = vmatprep.subr.mxu0 0.0
    %456 = vmatpush1.msra.mxu0 0.0
    %457 = vmatprep.subr.mxu0 0.0
    %458 = vmatpush1.msra.mxu0 0.0
    %459 = vmatprep.subr.mxu0 0.0
    %460 = vmatpush1.msra.mxu0 0.0
    %461 = vmatprep.subr.mxu0 0.0
    %462 = vmatpush1.msra.mxu0 0.0
    %463 = vmatprep.subr.mxu0 0.0
    %464 = vmatpush1.msra.mxu0 0.0
    %465 = vmatprep.subr.mxu0 0.0
    %466 = vmatpush1.msra.mxu0 0.0
    %467 = vmatprep.subr.mxu0 0.0
    %468 = vmatpush1.msra.mxu0 0.0
    %469 = vmatprep.subr.mxu0 0.0
    %470 = vmatpush1.msra.mxu0 0.0
    %471 = vmatprep.subr.mxu0 0.0
    %472 = vmatpush1.msra.mxu0 0.0
    %473 = vmatprep.subr.mxu0 0.0
    %474 = vmatpush1.msra.mxu0 0.0
    %475 = vmatprep.subr.mxu0 0.0
    %476 = vmatpush1.msra.mxu0 0.0
    %477 = vmatprep.subr.mxu0 0.0
    %478 = vmatpush1.msra.mxu0 0.0
    %479 = vmatprep.subr.mxu0 0.0
    %480 = vmatpush1.msra.mxu0 %v273
    %481 = vmatprep.subr.mxu0 0.0
    %482 = vmatpush2.msra.mxu0 0.0
    %483 = vmatprep.subr.mxu0 0.0
    %484 = vmatpush2.msra.mxu0 0.0
    %485 = vmatprep.subr.mxu0 0.0
    %486 = vmatpush2.msra.mxu0 0.0
    %487 = vmatprep.subr.mxu0 0.0
    %488 = vmatpush2.msra.mxu0 0.0
    %489 = vmatprep.subr.mxu0 0.0
    %490 = vmatpush2.msra.mxu0 0.0
    %491 = vmatprep.subr.mxu0 0.0
    %492 = vmatpush2.msra.mxu0 0.0
    %493 = vmatprep.subr.mxu0 0.0
    %494 = vmatpush2.msra.mxu0 0.0
    %495 = vmatprep.subr.mxu0 0.0
    %496 = vmatpush2.msra.mxu0 0.0
    %497 = vmatprep.subr.mxu0 0.0
    %498 = vmatpush2.msra.mxu0 0.0
    %499 = vmatprep.subr.mxu0 0.0
    %500 = vmatpush2.msra.mxu0 0.0
    %501 = vmatprep.subr.mxu0 0.0
    %502 = vmatpush2.msra.mxu0 0.0
    %503 = vmatprep.subr.mxu0 0.0
    %504 = vmatpush2.msra.mxu0 0.0
    %505 = vmatprep.subr.mxu0 0.0
    %506 = vmatpush2.msra.mxu0 0.0
    %507 = vmatprep.subr.mxu0 0.0
    %508 = vmatpush2.msra.mxu0 0.0
    %509 = vmatprep.subr.mxu0 0.0
    %510 = vmatpush2.msra.mxu0 0.0
    %511 = vmatprep.subr.mxu0 0.0
    %512 = vmatpush2.msra.mxu0 0.0
    %513 = vmatprep.mubr.f32.mxu0 0.0
    %514 = vmatmul.mubr.f32.gmra.mxu0 %v447
    %v515 = vpop.f32.mrf.mxu0
    %v516 = vadd.f32 0.0, %v515
    %v517 = vpop.f32.mrf.mxu0
    %518 = vdwg.mxu0
    %v520 = vsel %vm423, %v445, 0
    %522 = vmatprep.subr.mxu0 0.0
    %523 = vmatpush1.msra.mxu0 0.0
    %524 = vmatprep.subr.mxu0 0.0
    %525 = vmatpush1.msra.mxu0 0.0
    %526 = vmatprep.subr.mxu0 0.0
    %527 = vmatpush1.msra.mxu0 0.0
    %528 = vmatprep.subr.mxu0 0.0
    %529 = vmatpush1.msra.mxu0 0.0
    %530 = vmatprep.subr.mxu0 0.0
    %531 = vmatpush1.msra.mxu0 0.0
    %532 = vmatprep.subr.mxu0 0.0
    %533 = vmatpush1.msra.mxu0 0.0
    %534 = vmatprep.subr.mxu0 0.0
    %535 = vmatpush1.msra.mxu0 0.0
    %536 = vmatprep.subr.mxu0 0.0
    %537 = vmatpush1.msra.mxu0 0.0
    %538 = vmatprep.subr.mxu0 0.0
    %539 = vmatpush1.msra.mxu0 0.0
    %540 = vmatprep.subr.mxu0 0.0
    %541 = vmatpush1.msra.mxu0 0.0
    %542 = vmatprep.subr.mxu0 0.0
    %543 = vmatpush1.msra.mxu0 0.0
    %544 = vmatprep.subr.mxu0 0.0
    %545 = vmatpush1.msra.mxu0 0.0
    %546 = vmatprep.subr.mxu0 0.0
    %547 = vmatpush1.msra.mxu0 0.0
    %548 = vmatprep.subr.mxu0 0.0
    %549 = vmatpush1.msra.mxu0 0.0
    %550 = vmatprep.subr.mxu0 0.0
    %551 = vmatpush1.msra.mxu0 0.0
    %552 = vmatprep.subr.mxu0 0.0
    %553 = vmatpush1.msra.mxu0 %v278
    %554 = vmatprep.subr.mxu0 0.0
    %555 = vmatpush2.msra.mxu0 0.0
    %556 = vmatprep.subr.mxu0 0.0
    %557 = vmatpush2.msra.mxu0 0.0
    %558 = vmatprep.subr.mxu0 0.0
    %559 = vmatpush2.msra.mxu0 0.0
    %560 = vmatprep.subr.mxu0 0.0
    %561 = vmatpush2.msra.mxu0 0.0
    %562 = vmatprep.subr.mxu0 0.0
    %563 = vmatpush2.msra.mxu0 0.0
    %564 = vmatprep.subr.mxu0 0.0
    %565 = vmatpush2.msra.mxu0 0.0
    %566 = vmatprep.subr.mxu0 0.0
    %567 = vmatpush2.msra.mxu0 0.0
    %568 = vmatprep.subr.mxu0 0.0
    %569 = vmatpush2.msra.mxu0 0.0
    %570 = vmatprep.subr.mxu0 0.0
    %571 = vmatpush2.msra.mxu0 0.0
    %572 = vmatprep.subr.mxu0 0.0
    %573 = vmatpush2.msra.mxu0 0.0
    %574 = vmatprep.subr.mxu0 0.0
    %575 = vmatpush2.msra.mxu0 0.0
    %576 = vmatprep.subr.mxu0 0.0
    %577 = vmatpush2.msra.mxu0 0.0
    %578 = vmatprep.subr.mxu0 0.0
    %579 = vmatpush2.msra.mxu0 0.0
    %580 = vmatprep.subr.mxu0 0.0
    %581 = vmatpush2.msra.mxu0 0.0
    %582 = vmatprep.subr.mxu0 0.0
    %583 = vmatpush2.msra.mxu0 0.0
    %584 = vmatprep.subr.mxu0 0.0
    %585 = vmatpush2.msra.mxu0 0.0
    %586 = vmatprep.mubr.f32.mxu0 0.0
    %587 = vmatmul.mubr.f32.gmra.mxu0 %v520
    %v588 = vpop.f32.mrf.mxu0
    %v589 = vadd.f32 0.0, %v588
    %v590 = vpop.f32.mrf.mxu0
    %591 = vdwg.mxu0
    %v592 = vld [vmem:[#allocation7] sm:$0xff]
    %v593 = vld [vmem:[#allocation7 + $0x8] sm:$0xff]
    %v594 = vld [vmem:[#allocation7 + $0x10] sm:$0xff]
    %v595 = vld [vmem:[#allocation7 + $0x18] sm:$0xff]
    %v596 = vld [vmem:[#allocation7 + $0x20] sm:$0xff]
    %v597 = vld [vmem:[#allocation7 + $0x28] sm:$0xff]
    %v598 = vld [vmem:[#allocation7 + $0x30] sm:$0xff]
    %v599 = vld [vmem:[#allocation7 + $0x38] sm:$0xff]
    %v600 = vld [vmem:[#allocation7 + $0x40] sm:$0xff]
    %v601 = vld [vmem:[#allocation7 + $0x48] sm:$0xff]
    %v602 = vld [vmem:[#allocation7 + $0x50] sm:$0xff]
    %v603 = vld [vmem:[#allocation7 + $0x58] sm:$0xff]
    %v604 = vld [vmem:[#allocation7 + $0x60] sm:$0xff]
    %v605 = vld [vmem:[#allocation7 + $0x68] sm:$0xff]
    %v606 = vld [vmem:[#allocation7 + $0x70] sm:$0xff]
    %v607 = vld [vmem:[#allocation7 + $0x78] sm:$0xff]
    %v608 = vld [vmem:[%s4] sm:$0x1]
    %v610 = vlaneseq
    %v611 = vshrl.u32 %v610, 7
    %v612 = vsub.s32 0, %v611
    %v613 = vrot.slane %v608, %v612
    %615 = vmatprep.subr.mxu0 0.0
    %616 = vmatpush1.msra.mxu0 %v607
    %617 = vmatprep.subr.mxu0 0.0
    %618 = vmatpush1.msra.mxu0 %v606
    %619 = vmatprep.subr.mxu0 0.0
    %620 = vmatpush1.msra.mxu0 %v605
    %621 = vmatprep.subr.mxu0 0.0
    %622 = vmatpush1.msra.mxu0 %v604
    %623 = vmatprep.subr.mxu0 0.0
    %624 = vmatpush1.msra.mxu0 %v603
    %625 = vmatprep.subr.mxu0 0.0
    %626 = vmatpush1.msra.mxu0 %v602
    %627 = vmatprep.subr.mxu0 0.0
    %628 = vmatpush1.msra.mxu0 %v601
    %629 = vmatprep.subr.mxu0 0.0
    %630 = vmatpush1.msra.mxu0 %v600
    %631 = vmatprep.subr.mxu0 0.0
    %632 = vmatpush1.msra.mxu0 %v599
    %633 = vmatprep.subr.mxu0 0.0
    %634 = vmatpush1.msra.mxu0 %v598
    %635 = vmatprep.subr.mxu0 0.0
    %636 = vmatpush1.msra.mxu0 %v597
    %637 = vmatprep.subr.mxu0 0.0
    %638 = vmatpush1.msra.mxu0 %v596
    %639 = vmatprep.subr.mxu0 0.0
    %640 = vmatpush1.msra.mxu0 %v595
    %641 = vmatprep.subr.mxu0 0.0
    %642 = vmatpush1.msra.mxu0 %v594
    %643 = vmatprep.subr.mxu0 0.0
    %644 = vmatpush1.msra.mxu0 %v593
    %645 = vmatprep.subr.mxu0 0.0
    %646 = vmatpush1.msra.mxu0 %v592
    %647 = vmatprep.subr.mxu0 0.0
    %648 = vmatpush2.msra.mxu0 0.0
    %649 = vmatprep.subr.mxu0 0.0
    %650 = vmatpush2.msra.mxu0 0.0
    %651 = vmatprep.subr.mxu0 0.0
    %652 = vmatpush2.msra.mxu0 0.0
    %653 = vmatprep.subr.mxu0 0.0
    %654 = vmatpush2.msra.mxu0 0.0
    %655 = vmatprep.subr.mxu0 0.0
    %656 = vmatpush2.msra.mxu0 0.0
    %657 = vmatprep.subr.mxu0 0.0
    %658 = vmatpush2.msra.mxu0 0.0
    %659 = vmatprep.subr.mxu0 0.0
    %660 = vmatpush2.msra.mxu0 0.0
    %661 = vmatprep.subr.mxu0 0.0
    %662 = vmatpush2.msra.mxu0 0.0
    %663 = vmatprep.subr.mxu0 0.0
    %664 = vmatpush2.msra.mxu0 0.0
    %665 = vmatprep.subr.mxu0 0.0
    %666 = vmatpush2.msra.mxu0 0.0
    %667 = vmatprep.subr.mxu0 0.0
    %668 = vmatpush2.msra.mxu0 0.0
    %669 = vmatprep.subr.mxu0 0.0
    %670 = vmatpush2.msra.mxu0 0.0
    %671 = vmatprep.subr.mxu0 0.0
    %672 = vmatpush2.msra.mxu0 0.0
    %673 = vmatprep.subr.mxu0 0.0
    %674 = vmatpush2.msra.mxu0 0.0
    %675 = vmatprep.subr.mxu0 0.0
    %676 = vmatpush2.msra.mxu0 0.0
    %677 = vmatprep.subr.mxu0 0.0
    %678 = vmatpush2.msra.mxu0 0.0
    %679 = vmatprep.mubr.f32.mxu0 0.0
    %680 = vmatmul.mubr.f32.gmra.mxu0 %v516
    %v681 = vpop.f32.mrf.mxu0
    %v682 = vadd.f32 %v613, %v681
    %v683 = vpop.f32.mrf.mxu0
    %684 = vmatprep.mubr.f32.mxu0 0.0
    %685 = vmatmul.mubr.f32.gmra.mxu0 %v589
    %v686 = vpop.f32.mrf.mxu0
    %v687 = vadd.f32 %v613, %v686
    %v688 = vpop.f32.mrf.mxu0
    %689 = vdwg.mxu0
    %690 = vst [vmem:[#allocation8] sm:$0xff] %v682
    %691 = vst [vmem:[#allocation8 + $0x8] sm:$0xff] %v687
    // Predicated region
    $region34: #{tpu_custom_call.1} parent=1 // pred_check
      _
    $region35: #{tpu_custom_call.1} parent=1 // pred_check_branch
      %693 = sbr.rel (0) target = $region37
    $region36: #{tpu_custom_call.1} parent=1 // pred_region
      %s695 = ssub.s32 256, 256
      %696 = vsyncadd [#allocation4], %s695
      %s697 = sshll.u32 [#allocation8], 4
      %s698 = int_to_ptr.vmem [resolvable:$true] %s697
      %703 = dma.vmem_to_hbm [thread:$0]  %s698, 256, %s5, [#allocation4], 128, 128, 8
    $region37: #{tpu_custom_call.1} parent=1 // pred_fallthru
      _
    // Predicated region
    $region38: #{tpu_custom_call.1} parent=1 // pred_check
      _
    $region39: #{tpu_custom_call.1} parent=1 // pred_check_branch
      %705 = sbr.rel (0) target = $region41
    $region40: #{tpu_custom_call.1} parent=1 // pred_region
      %706 = dma.done [#allocation4], 256
    $region41: #{tpu_custom_call.1} parent=1 // pred_fallthru
      _
    %707 = vsyncpa [#allocation3], 1
    %708 = vsyncpa [#allocation6], 1
    %709 = vsyncpa [#allocation4], 1

</llo_original>
